<compile_context>
chip_gen: v5e
topology: v5e:2x2
jax: 0.10.0
libtpu: 0.0.40
codegen_flags: <defaults>
</compile_context>

<pallas_src>
import functools

import jax
import jax.numpy as jnp
from jax.experimental import pallas as pl
from jax.experimental.pallas import tpu as pltpu


def _bond_float_rbf_kernel(g_ref, x_ref, c_ref, m_ref, w_ref, b_ref, o_ref):
    """One N-tile.

    x_ref: [TM, P]      P edge-interleaved streams (edge n = P*m + j)
    c_ref: [1,  P*C]    centers tiled P times
    m_ref: [P,  P*C]    m[j, j'*C + c] = 1.0 if j == j' else 0.0
    w_ref: [P*C, P*D]   kron(I_P, W.T)  (block-diagonal)
    b_ref: [1,  P*D]    bias tiled P times
    o_ref: [TM, P*D]    packed output tile (lane-dense, unmasked stores)
    """
    gamma = g_ref[0, 0]                       # scalar gamma from SMEM
    x4 = x_ref[...]                           # [TM, P]
    p = x4.shape[1]

    # x_b[m, j*C + c] = x4[m, j]; built with exact ops (mul by 1.0, add 0.0).
    x_b = x4[:, 0:1] * m_ref[0:1, :]          # [TM, P*C]
    for j in range(1, p):                     # static unroll (P is tiny)
        x_b = x_b + x4[:, j:j + 1] * m_ref[j:j + 1, :]

    diff = x_b - c_ref[...]                   # [TM, P*C]
    rbf = jnp.exp(-gamma * (diff * diff))     # VPU mul + EUP exp

    out = jnp.dot(rbf, w_ref[...],            # [TM, P*C] @ [P*C, P*D] -> [TM, P*D]
                  preferred_element_type=jnp.float32,
                  precision=jax.lax.Precision.HIGHEST)
    o_ref[...] = out + b_ref[...]             # full-lane (128) unmasked stores


@functools.partial(jax.jit, static_argnames=("tile_n",))
def bond_float_rbf(x, centers, gamma, weight, bias, *, tile_n=16384):
    """BondFloatRBF forward.

    x:       [N]    edge float features
    centers: [C]    RBF centers
    gamma:   scalar RBF gamma
    weight:  [D, C] nn.Linear weight (PyTorch layout)
    bias:    [D]    nn.Linear bias
    returns: [N, D] float32

    tile_n: edges per grid step. Recommended ~16384 (v5e/v6e), 32768-65536 (v7x).
    """
    n = x.shape[0]
    c = centers.shape[0]
    d = weight.shape[0]
    f32 = jnp.float32

    # Pack P edges per output row so the packed last dim is 128 (lane dense).
    p = 128 // d if (d <= 128 and 128 % d == 0) else 1   # D=32 -> P=4
    granule = 8 * p

    def _round_up(a, m):
        return ((a + m - 1) // m) * m

    # Tile choice: as large as requested (amortizes ~0.35us/step), but keep
    # >= ~8 tiles at large N (v7x megacore sharding) and never over-pad small N.
    tn = min(int(tile_n), max(4096, _round_up(pl.cdiv(n, 8), granule)))
    tn = max(granule, (tn // granule) * granule)
    tn = min(tn, _round_up(n, granule))
    n_pad = _round_up(n, tn)
    num_tiles = n_pad // tn
    tm = tn // p

    x_pad = jnp.pad(x.astype(f32), (0, n_pad - n))       # pad value 0 is exp-safe
    x4 = x_pad.reshape(n_pad // p, p)                     # free metadata reshape
    c4 = jnp.tile(centers.astype(f32), p).reshape(1, p * c)
    mask = jnp.kron(jnp.eye(p, dtype=f32), jnp.ones((1, c), f32))     # [P, P*C]
    w4t = jnp.kron(jnp.eye(p, dtype=f32), weight.astype(f32).T)       # [P*C, P*D]
    b4 = jnp.tile(bias.astype(f32), p).reshape(1, p * d)
    g_smem = jnp.asarray(gamma, f32).reshape(1, 1)

    out_packed = pl.pallas_call(
        _bond_float_rbf_kernel,
        out_shape=jax.ShapeDtypeStruct((n_pad // p, p * d), f32),
        grid=(num_tiles,),
        in_specs=[
            pl.BlockSpec(memory_space=pltpu.MemorySpace.SMEM),      # gamma scalar
            pl.BlockSpec((tm, p), lambda i: (i, 0)),                # x, tiled over N
            pl.BlockSpec((1, p * c), lambda i: (0, 0)),             # centers (resident)
            pl.BlockSpec((p, p * c), lambda i: (0, 0)),             # stream masks
            pl.BlockSpec((p * c, p * d), lambda i: (0, 0)),         # block-diag W.T
            pl.BlockSpec((1, p * d), lambda i: (0, 0)),             # bias
        ],
        out_specs=pl.BlockSpec((tm, p * d), lambda i: (i, 0)),      # packed, lane-dense
        compiler_params=pltpu.CompilerParams(
            dimension_semantics=("parallel",),       # shard tiles across TCs (v7x)
            vmem_limit_bytes=32 * 1024 * 1024,
        ),
    )(g_smem, x4, c4, mask, w4t, b4)

    out = out_packed.reshape(n_pad, d)    # free reshape: packed[n//P, (n%P)*D+d] -> [n, d]
    return out if n == n_pad else out[:n]


def reference(x, centers, gamma, weight, bias):
    rbf = jnp.exp(-gamma * (x.reshape(-1, 1) - centers.reshape(1, -1)) ** 2)
    return (jnp.dot(rbf, weight.T, precision=jax.lax.Precision.HIGHEST)
            + bias.reshape(1, -1))


if __name__ == "__main__":
    key = jax.random.PRNGKey(0)
    k_x, k_w, k_b = jax.random.split(key, 3)

    embed_dim = 32
    centers = jnp.arange(0.0, 2.0, 0.1, dtype=jnp.float32)    # C = 20
    gamma = 10.0
    n_edges = 1000        # non-multiple of the tile -> exercises tail padding

    c = centers.shape[0]
    bound = 1.0 / jnp.sqrt(jnp.float32(c))
    # nn.Linear(len(centers), embed_dim): weight [D, C], bias [D]
    weight = jax.random.uniform(k_w, (embed_dim, c), jnp.float32, -bound, bound)
    bias = jax.random.uniform(k_b, (embed_dim,), jnp.float32, -bound, bound)

    # Edge float features roughly in the centers' range.
    x = jax.random.uniform(k_x, (n_edges,), jnp.float32, 0.0, 2.0)

    ref = reference(x, centers, gamma, weight, bias)

    # Small tile so the demo runs a multi-step grid (1000 -> 4 tiles of 256 edges).
    out = bond_float_rbf(x, centers, gamma, weight, bias, tile_n=256)
    out = jax.block_until_ready(out)
    assert out.shape == (n_edges, embed_dim)
    assert jnp.allclose(out, ref, atol=1e-5, rtol=1e-5), \
        float(jnp.max(jnp.abs(out - ref)))

    # Also exercise the default (production) tile path.
    out2 = jax.block_until_ready(bond_float_rbf(x, centers, gamma, weight, bias))
    assert jnp.allclose(out2, ref, atol=1e-5, rtol=1e-5), \
        float(jnp.max(jnp.abs(out2 - ref)))

    print("KERNEL_OK")
</pallas_src>

<mosaic_0001>
module attributes {stable_mosaic.version = 11 : i64} {
  func.func @_bond_float_rbf_kernel(%arg0: i32, %arg1: memref<1x1xf32, #tpu.memory_space<smem>>, %arg2: memref<64x4xf32, #tpu.memory_space<vmem>>, %arg3: memref<1x80xf32, #tpu.memory_space<vmem>>, %arg4: memref<4x80xf32, #tpu.memory_space<vmem>>, %arg5: memref<80x128xf32, #tpu.memory_space<vmem>>, %arg6: memref<1x128xf32, #tpu.memory_space<vmem>>, %arg7: memref<64x128xf32, #tpu.memory_space<vmem>>) attributes {dimension_semantics = [#tpu.dimension_semantics<parallel>], iteration_bounds = array<i64: 4>, scalar_prefetch = 0 : i64, scratch_operands = 0 : i64, tpu.core_type = #tpu.core_type<tc>, window_params = [{transform_indices = @transform_0, window_bounds = array<i64: 1, 1>}, {transform_indices = @transform_1, window_bounds = array<i64: 64, 4>}, {pipeline_mode = #tpu.pipeline_mode<synchronous>, transform_indices = @transform_2, window_bounds = array<i64: 1, 80>}, {pipeline_mode = #tpu.pipeline_mode<synchronous>, transform_indices = @transform_3, window_bounds = array<i64: 4, 80>}, {pipeline_mode = #tpu.pipeline_mode<synchronous>, transform_indices = @transform_4, window_bounds = array<i64: 80, 128>}, {pipeline_mode = #tpu.pipeline_mode<synchronous>, transform_indices = @transform_5, window_bounds = array<i64: 1, 128>}, {transform_indices = @transform_6, window_bounds = array<i64: 64, 128>}]} {
    %c0 = arith.constant 0 : index
    %c0_0 = arith.constant 0 : index
    %0 = memref.load %arg1[%c0, %c0_0] : memref<1x1xf32, #tpu.memory_space<smem>>
    %c0_1 = arith.constant 0 : index
    %c0_2 = arith.constant 0 : index
    %1 = vector.load %arg2[%c0_1, %c0_2] : memref<64x4xf32, #tpu.memory_space<vmem>>, vector<64x4xf32>
    %2 = vector.extract_strided_slice %1 {offsets = [0, 0], sizes = [64, 1], strides = [1, 1]} : vector<64x4xf32> to vector<64x1xf32>
    %c0_3 = arith.constant 0 : index
    %c0_4 = arith.constant 0 : index
    %3 = vector.load %arg4[%c0_3, %c0_4] : memref<4x80xf32, #tpu.memory_space<vmem>>, vector<1x80xf32>
    %4 = vector.broadcast %2 : vector<64x1xf32> to vector<64x80xf32>
    %5 = vector.broadcast %3 : vector<1x80xf32> to vector<64x80xf32>
    %6 = arith.mulf %4, %5 : vector<64x80xf32>
    %7 = vector.extract_strided_slice %1 {offsets = [0, 1], sizes = [64, 1], strides = [1, 1]} : vector<64x4xf32> to vector<64x1xf32>
    %c1 = arith.constant 1 : index
    %c0_5 = arith.constant 0 : index
    %8 = vector.load %arg4[%c1, %c0_5] : memref<4x80xf32, #tpu.memory_space<vmem>>, vector<1x80xf32>
    %9 = vector.broadcast %7 : vector<64x1xf32> to vector<64x80xf32>
    %10 = vector.broadcast %8 : vector<1x80xf32> to vector<64x80xf32>
    %11 = arith.mulf %9, %10 : vector<64x80xf32>
    %12 = arith.addf %6, %11 : vector<64x80xf32>
    %13 = vector.extract_strided_slice %1 {offsets = [0, 2], sizes = [64, 1], strides = [1, 1]} : vector<64x4xf32> to vector<64x1xf32>
    %c2 = arith.constant 2 : index
    %c0_6 = arith.constant 0 : index
    %14 = vector.load %arg4[%c2, %c0_6] : memref<4x80xf32, #tpu.memory_space<vmem>>, vector<1x80xf32>
    %15 = vector.broadcast %13 : vector<64x1xf32> to vector<64x80xf32>
    %16 = vector.broadcast %14 : vector<1x80xf32> to vector<64x80xf32>
    %17 = arith.mulf %15, %16 : vector<64x80xf32>
    %18 = arith.addf %12, %17 : vector<64x80xf32>
    %19 = vector.extract_strided_slice %1 {offsets = [0, 3], sizes = [64, 1], strides = [1, 1]} : vector<64x4xf32> to vector<64x1xf32>
    %c3 = arith.constant 3 : index
    %c0_7 = arith.constant 0 : index
    %20 = vector.load %arg4[%c3, %c0_7] : memref<4x80xf32, #tpu.memory_space<vmem>>, vector<1x80xf32>
    %21 = vector.broadcast %19 : vector<64x1xf32> to vector<64x80xf32>
    %22 = vector.broadcast %20 : vector<1x80xf32> to vector<64x80xf32>
    %23 = arith.mulf %21, %22 : vector<64x80xf32>
    %24 = arith.addf %18, %23 : vector<64x80xf32>
    %c0_8 = arith.constant 0 : index
    %c0_9 = arith.constant 0 : index
    %25 = vector.load %arg3[%c0_8, %c0_9] : memref<1x80xf32, #tpu.memory_space<vmem>>, vector<1x80xf32>
    %26 = vector.broadcast %25 : vector<1x80xf32> to vector<64x80xf32>
    %27 = arith.subf %24, %26 : vector<64x80xf32>
    %cst = arith.constant 0.000000e+00 : f32
    %28 = arith.subf %cst, %0 : f32
    %29 = arith.mulf %27, %27 : vector<64x80xf32>
    %30 = vector.broadcast %28 : f32 to vector<64x80xf32>
    %31 = arith.mulf %30, %29 : vector<64x80xf32>
    %32 = math.exp %31 : vector<64x80xf32>
    %c0_10 = arith.constant 0 : index
    %c0_11 = arith.constant 0 : index
    %33 = vector.load %arg5[%c0_10, %c0_11] : memref<80x128xf32, #tpu.memory_space<vmem>>, vector<80x128xf32>
    %cst_12 = arith.constant dense<0.000000e+00> : vector<64x128xf32>
    %34 = tpu.matmul %32, %33, %cst_12 {dimension_numbers = #tpu.dot_dimension_numbers<[1], [0], [0], [1], [0, 0, 1, 1], [], []>, precision = #tpu.contract_precision<fp32>} : vector<64x80xf32>, vector<80x128xf32>, vector<64x128xf32> -> vector<64x128xf32>
    %c0_13 = arith.constant 0 : index
    %c0_14 = arith.constant 0 : index
    %35 = vector.load %arg6[%c0_13, %c0_14] : memref<1x128xf32, #tpu.memory_space<vmem>>, vector<1x128xf32>
    %36 = vector.broadcast %35 : vector<1x128xf32> to vector<64x128xf32>
    %37 = arith.addf %34, %36 : vector<64x128xf32>
    %c0_15 = arith.constant 0 : index
    %c0_16 = arith.constant 0 : index
    %38 = vector.load %arg7[%c0_15, %c0_16] : memref<64x128xf32, #tpu.memory_space<vmem>>, vector<64x128xf32>
    tpu.vector_store %arg7[%c0_15, %c0_16], %37 {strides = array<i32>} : memref<64x128xf32, #tpu.memory_space<vmem>>, vector<64x128xf32>,
    return
  }
  func.func @transform_0(%arg0: i32) -> (i32, i32) {
    %c0_i32 = arith.constant 0 : i32
    %c0_i32_0 = arith.constant 0 : i32
    %c0_i32_1 = arith.constant 0 : i32
    return %c0_i32, %c0_i32_0 : i32, i32
  }
  func.func @transform_1(%arg0: i32) -> (i32, i32) {
    %c0_i32 = arith.constant 0 : i32
    %c0_i32_0 = arith.constant 0 : i32
    return %arg0, %c0_i32 : i32, i32
  }
  func.func @transform_2(%arg0: i32) -> (i32, i32) {
    %c0_i32 = arith.constant 0 : i32
    %c0_i32_0 = arith.constant 0 : i32
    %c0_i32_1 = arith.constant 0 : i32
    return %c0_i32, %c0_i32_0 : i32, i32
  }
  func.func @transform_3(%arg0: i32) -> (i32, i32) {
    %c0_i32 = arith.constant 0 : i32
    %c0_i32_0 = arith.constant 0 : i32
    %c0_i32_1 = arith.constant 0 : i32
    return %c0_i32, %c0_i32_0 : i32, i32
  }
  func.func @transform_4(%arg0: i32) -> (i32, i32) {
    %c0_i32 = arith.constant 0 : i32
    %c0_i32_0 = arith.constant 0 : i32
    %c0_i32_1 = arith.constant 0 : i32
    return %c0_i32, %c0_i32_0 : i32, i32
  }
  func.func @transform_5(%arg0: i32) -> (i32, i32) {
    %c0_i32 = arith.constant 0 : i32
    %c0_i32_0 = arith.constant 0 : i32
    %c0_i32_1 = arith.constant 0 : i32
    return %c0_i32, %c0_i32_0 : i32, i32
  }
  func.func @transform_6(%arg0: i32) -> (i32, i32) {
    %c0_i32 = arith.constant 0 : i32
    %c0_i32_0 = arith.constant 0 : i32
    return %arg0, %c0_i32 : i32, i32
  }
}

</mosaic_0001>

<llo_original>
// kernel: tile.18
$region0: #{tile.18}
  #allocation0 [shape = 's32[1]{0}', space=sflag, size = 0x4, scoped, tag = 'scoped memory for tile.18']
  %s0 = inlined_call_operand.vmem [shape: f32[32], index: 0, kind: input, shape index: {}]
  %s1 = inlined_call_operand.vmem [shape: f32[4,32], index: 1, kind: output, shape index: {}]
  // Predicated region
  $region2: #{tile.18} parent=0 // pred_check
    _
  $region3: #{tile.18} parent=0 // pred_check_branch
    %3 = sbr.rel (0) target = $region5
  $region4: #{tile.18} parent=0 // pred_region
    _
  $region5: #{tile.18} parent=0 // pred_fallthru
    _
  %v4 = vld [vmem:[%s0] ss:$0 sm:$0xff]
  %5 = vst [vmem:[%s1] sm:$0xf] %v4

// kernel: tile.13
$region0: #{tile.13}
  #allocation0 [shape = 's32[1]{0}', space=sflag, size = 0x4, scoped, tag = 'scoped memory for tile.13']
  %s0 = inlined_call_operand.vmem [shape: f32[20], index: 0, kind: input, shape index: {}]
  %s1 = inlined_call_operand.vmem [shape: f32[4,20], index: 1, kind: output, shape index: {}]
  // Predicated region
  $region2: #{tile.13} parent=0 // pred_check
    _
  $region3: #{tile.13} parent=0 // pred_check_branch
    %3 = sbr.rel (0) target = $region5
  $region4: #{tile.13} parent=0 // pred_region
    _
  $region5: #{tile.13} parent=0 // pred_fallthru
    _
  %v4 = vld [vmem:[%s0] ss:$0 sm:$0xff]
  %5 = vst [vmem:[%s1] sm:$0xf] %v4

// kernel: tile.14
$region0: #{tile.14}
  %s0 = inlined_call_operand.vmem [shape: f32[4,20], index: 0, kind: input, shape index: {}]
  %s1 = inlined_call_operand.vmem [shape: f32[1,80], index: 1, kind: output, shape index: {}]
  $region1: #{tile.14} parent=0
    #allocation0 [shape = 'u8[4096]{0}', space=vmem, size = 0x1000, scoped, tag = 'scoped mem for output reshape']
    #allocation1 [shape = 'u8[4096]{0}', space=vmem, size = 0x1000, scoped, tag = 'scoped mem for input reshape']
    %s3 = ssub.s32 16, 1
    %v4 = vld [vmem:[%s0] sm:%s3]
    %5 = vst [vmem:[#allocation1] sm:%s3] %v4
    %v6 = vld [vmem:[#allocation1] sm:$0x1]
    %vm7 = vcmask 162816
    %8 = vst.msk [vmem:[#allocation0] sm:$0x1] %vm7, %v6
    %s9 = scalar_lea.vmem [#allocation1], 3
    %v10 = vld [vmem:[%s9] sm:$0x1]
    %11 = vrot.lane.b32.xlu0 %v10, 60
    %v12 = vpop.permute.xlu0 %11
    %vm13 = vcmask 654816
    %14 = vst.msk [vmem:[#allocation0] sm:$0x1] %vm13, %v12
    %s15 = scalar_lea.vmem [#allocation1], 2
    %v16 = vld [vmem:[%s15] sm:$0x1]
    %17 = vrot.lane.b32.xlu0 %v16, 40
    %v18 = vpop.permute.xlu0 %17
    %vm19 = vcmask 490816
    %20 = vst.msk [vmem:[#allocation0] sm:$0x1] %vm19, %v18
    %s21 = scalar_lea.vmem [#allocation1], 1
    %v22 = vld [vmem:[%s21] sm:$0x1]
    %23 = vrot.lane.b32.xlu0 %v22, 20
    %v24 = vpop.permute.xlu0 %23
    %vm25 = vcmask 326816
    %26 = vst.msk [vmem:[#allocation0] sm:$0x1] %vm25, %v24
    %s28 = ssub.s32 2, 1
    %v29 = vld [vmem:[#allocation0] sm:%s28]
    %s31 = ssub.s32 2, 1
    %32 = vst [vmem:[%s1] sm:%s31] %v29

// kernel: tile.19
$region0: #{tile.19}
  %s0 = inlined_call_operand.vmem [shape: f32[4,32], index: 0, kind: input, shape index: {}]
  %s1 = inlined_call_operand.vmem [shape: f32[1,128], index: 1, kind: output, shape index: {}]
  $region1: #{tile.19} parent=0
    #allocation0 [shape = 'u8[4096]{0}', space=vmem, size = 0x1000, scoped, tag = 'scoped mem for output reshape']
    #allocation1 [shape = 'u8[4096]{0}', space=vmem, size = 0x1000, scoped, tag = 'scoped mem for input reshape']
    %s3 = ssub.s32 16, 1
    %v4 = vld [vmem:[%s0] sm:%s3]
    %5 = vst [vmem:[#allocation1] sm:%s3] %v4
    %v6 = vld [vmem:[#allocation1] sm:$0x1]
    %vm7 = vcmask 261120
    %8 = vst.msk [vmem:[#allocation0] sm:$0x1] %vm7, %v6
    %s9 = scalar_lea.vmem [#allocation1], 3
    %v10 = vld [vmem:[%s9] sm:$0x1]
    %11 = vrot.lane.b32.xlu0 %v10, 96
    %v12 = vpop.permute.xlu0 %11
    %vm13 = vcmask 1048320
    %14 = vst.msk [vmem:[#allocation0] sm:$0x1] %vm13, %v12
    %s15 = scalar_lea.vmem [#allocation1], 2
    %v16 = vld [vmem:[%s15] sm:$0x1]
    %17 = vrot.lane.b32.xlu0 %v16, 64
    %v18 = vpop.permute.xlu0 %17
    %vm19 = vcmask 785920
    %20 = vst.msk [vmem:[#allocation0] sm:$0x1] %vm19, %v18
    %s21 = scalar_lea.vmem [#allocation1], 1
    %v22 = vld [vmem:[%s21] sm:$0x1]
    %23 = vrot.lane.b32.xlu0 %v22, 32
    %v24 = vpop.permute.xlu0 %23
    %vm25 = vcmask 523520
    %26 = vst.msk [vmem:[#allocation0] sm:$0x1] %vm25, %v24
    %s28 = ssub.s32 2, 1
    %v29 = vld [vmem:[#allocation0] sm:%s28]
    %s31 = ssub.s32 2, 1
    %32 = vst [vmem:[%s1] sm:%s31] %v29

// kernel: bond_float_rbf.1
$region0: #{bond_float_rbf.1}
  #allocation0 [shape = 'u32[]', space=smem, size = 0x4, offset = 0x4, fixed_abs, tag = 'smem constant byte address 0x4 - core index']
  #allocation1 [shape = 'u32[72,128]{1,0:T(1,128)}', space=vmem, size = 0x9000, scoped, tag = 'internal scratch']
  #allocation2 [shape = 'f32[1,1]{1,0:T(1,128)S(6)}', space=smem, size = 0x200, scoped, tag = 'scoped memory for bond_float_rbf.1']
  %s0 = inlined_call_operand.<no memory space> [shape: f32[1,1], index: 0, kind: input, shape index: {}]
  %s1 = inlined_call_operand.vmem [shape: f32[256,4], index: 1, kind: input, shape index: {}]
  %s2 = inlined_call_operand.vmem [shape: f32[1,80], index: 2, kind: input, shape index: {}]
  %s3 = inlined_call_operand.vmem [shape: f32[4,80], index: 3, kind: input, shape index: {}]
  %s4 = inlined_call_operand.vmem [shape: f32[80,128], index: 4, kind: input, shape index: {}]
  %s5 = inlined_call_operand.vmem [shape: f32[1,128], index: 5, kind: input, shape index: {}]
  %s6 = inlined_call_operand.vmem [shape: f32[256,128], index: 6, kind: output, shape index: {}]
  %s7 = sld [smem:[#allocation0]]
  $region57: #{bond_float_rbf.1} parent=0
    _
  %s9 = ssub.s32 1, %s7
  %s10 = scalar_select 0, %s9, %s7
  %11 = sst [smem:[#allocation2]] %s0
  loop: start=0, step=1, limit=6
  $region2: #{bond_float_rbf.1} parent=0 // loop_pre_header
    _
  $region3: #{bond_float_rbf.1} parent=0 // loop_header
    %s13 = sphi 0, %s17
    %p14 = scmp.ge.s32.totalorder %s13, 6
    %s21 = sphi 0, %s21
    %s23 = sphi 0, %s21
    %s24 = sphi 0, %s23
    %s38 = sphi 0, %s24
    %s44 = sphi 0, %s46
    %s47 = sphi 0, %s44
    %s48 = sphi 0, %s47
    %s64 = sphi 0, %s48
    %s68 = sphi 0, %s68
    %s70 = sphi 0, %s68
    %s71 = sphi 0, %s70
    %s85 = sphi 0, %s71
    %s89 = sphi 0, %s89
    %s91 = sphi 0, %s89
    %s92 = sphi 0, %s91
    %s106 = sphi 0, %s92
    %s110 = sphi 0, %s110
    %s112 = sphi 0, %s110
    %s113 = sphi 0, %s112
    %s127 = sphi 0, %s113
    %s131 = sphi 0, %s131
    %s133 = sphi 0, %s131
    %s134 = sphi 0, %s133
    %s148 = sphi 0, %s134
    %s154 = sphi 0, %s156
    %s157 = sphi 0, %s154
    %s158 = sphi 0, %s157
    %s174 = sphi 0, %s158
  $region4: #{bond_float_rbf.1} parent=0 // loop_header_branch
    %16 = sbr.rel (%p14) target = $region8
  $region5: #{bond_float_rbf.1} parent=0 // loop_body
    %s18 = ssub.s32 %s13, 1
    %s19 = ssub.s32 %s13, 2
    %s20 = sadd.s32 %s13, 1
    %s22 = sadd.s32 %s21, 1
    %p25 = scmp.eq.s32.totalorder %s13, 3
    %p26 = scmp.ne.s32.totalorder %s21, %s23
    %p27 = scmp.eq.s32.totalorder %s13, 0
    %p28 = por %p26, %p27
    %p29 = scmp.ne.s32.totalorder %s21, %s23
    %p30 = scmp.eq.s32.totalorder %s18, 3
    %p31 = por %p29, %p30
    %p32 = scmp.ne.s32.totalorder %s23, %s24
    %p33 = scmp.eq.s32.totalorder %s18, 0
    %p34 = por %p32, %p33
    %p35 = scmp.ne.s32.totalorder %s23, %s24
    %p36 = scmp.eq.s32.totalorder %s19, 3
    %p37 = por %p35, %p36
    %p39 = scmp.ne.s32.totalorder %s24, %s38
    %p40 = scmp.eq.s32.totalorder %s19, 0
    %p41 = por %p39, %p40
    %s42 = ssub.s32 %s13, %s20
    %p43 = scmp.eq.s32.totalorder %s42, 0
    %s45 = sadd.s32 %s44, 1
    %s46 = scalar_select %p43, %s44, %s45
    %p49 = pneg %p43
    %p50 = scmp.eq.s32.totalorder %s13, 3
    %p51 = por %p49, %p50
    %p52 = scmp.ne.s32.totalorder %s44, %s47
    %p53 = scmp.eq.s32.totalorder %s13, 0
    %p54 = por %p52, %p53
    %p55 = scmp.ne.s32.totalorder %s44, %s47
    %p56 = scmp.eq.s32.totalorder %s18, 3
    %p57 = por %p55, %p56
    %p58 = scmp.ne.s32.totalorder %s47, %s48
    %p59 = scmp.eq.s32.totalorder %s18, 0
    %p60 = por %p58, %p59
    %p61 = scmp.ne.s32.totalorder %s47, %s48
    %p62 = scmp.eq.s32.totalorder %s19, 3
    %p63 = por %p61, %p62
    %p65 = scmp.ne.s32.totalorder %s48, %s64
    %p66 = scmp.eq.s32.totalorder %s19, 0
    %p67 = por %p65, %p66
    %s69 = sadd.s32 %s68, 1
    %p72 = scmp.eq.s32.totalorder %s13, 3
    %p73 = scmp.ne.s32.totalorder %s68, %s70
    %p74 = scmp.eq.s32.totalorder %s13, 0
    %p75 = por %p73, %p74
    %p76 = scmp.ne.s32.totalorder %s68, %s70
    %p77 = scmp.eq.s32.totalorder %s18, 3
    %p78 = por %p76, %p77
    %p79 = scmp.ne.s32.totalorder %s70, %s71
    %p80 = scmp.eq.s32.totalorder %s18, 0
    %p81 = por %p79, %p80
    %p82 = scmp.ne.s32.totalorder %s70, %s71
    %p83 = scmp.eq.s32.totalorder %s19, 3
    %p84 = por %p82, %p83
    %p86 = scmp.ne.s32.totalorder %s71, %s85
    %p87 = scmp.eq.s32.totalorder %s19, 0
    %p88 = por %p86, %p87
    %s90 = sadd.s32 %s89, 1
    %p93 = scmp.eq.s32.totalorder %s13, 3
    %p94 = scmp.ne.s32.totalorder %s89, %s91
    %p95 = scmp.eq.s32.totalorder %s13, 0
    %p96 = por %p94, %p95
    %p97 = scmp.ne.s32.totalorder %s89, %s91
    %p98 = scmp.eq.s32.totalorder %s18, 3
    %p99 = por %p97, %p98
    %p100 = scmp.ne.s32.totalorder %s91, %s92
    %p101 = scmp.eq.s32.totalorder %s18, 0
    %p102 = por %p100, %p101
    %p103 = scmp.ne.s32.totalorder %s91, %s92
    %p104 = scmp.eq.s32.totalorder %s19, 3
    %p105 = por %p103, %p104
    %p107 = scmp.ne.s32.totalorder %s92, %s106
    %p108 = scmp.eq.s32.totalorder %s19, 0
    %p109 = por %p107, %p108
    %s111 = sadd.s32 %s110, 1
    %p114 = scmp.eq.s32.totalorder %s13, 3
    %p115 = scmp.ne.s32.totalorder %s110, %s112
    %p116 = scmp.eq.s32.totalorder %s13, 0
    %p117 = por %p115, %p116
    %p118 = scmp.ne.s32.totalorder %s110, %s112
    %p119 = scmp.eq.s32.totalorder %s18, 3
    %p120 = por %p118, %p119
    %p121 = scmp.ne.s32.totalorder %s112, %s113
    %p122 = scmp.eq.s32.totalorder %s18, 0
    %p123 = por %p121, %p122
    %p124 = scmp.ne.s32.totalorder %s112, %s113
    %p125 = scmp.eq.s32.totalorder %s19, 3
    %p126 = por %p124, %p125
    %p128 = scmp.ne.s32.totalorder %s113, %s127
    %p129 = scmp.eq.s32.totalorder %s19, 0
    %p130 = por %p128, %p129
    %s132 = sadd.s32 %s131, 1
    %p135 = scmp.eq.s32.totalorder %s13, 3
    %p136 = scmp.ne.s32.totalorder %s131, %s133
    %p137 = scmp.eq.s32.totalorder %s13, 0
    %p138 = por %p136, %p137
    %p139 = scmp.ne.s32.totalorder %s131, %s133
    %p140 = scmp.eq.s32.totalorder %s18, 3
    %p141 = por %p139, %p140
    %p142 = scmp.ne.s32.totalorder %s133, %s134
    %p143 = scmp.eq.s32.totalorder %s18, 0
    %p144 = por %p142, %p143
    %p145 = scmp.ne.s32.totalorder %s133, %s134
    %p146 = scmp.eq.s32.totalorder %s19, 3
    %p147 = por %p145, %p146
    %p149 = scmp.ne.s32.totalorder %s134, %s148
    %p150 = scmp.eq.s32.totalorder %s19, 0
    %p151 = por %p149, %p150
    %s152 = ssub.s32 %s13, %s20
    %p153 = scmp.eq.s32.totalorder %s152, 0
    %s155 = sadd.s32 %s154, 1
    %s156 = scalar_select %p153, %s154, %s155
    %p159 = pneg %p153
    %p160 = scmp.eq.s32.totalorder %s13, 3
    %p161 = por %p159, %p160
    %p162 = scmp.ne.s32.totalorder %s154, %s157
    %p163 = scmp.eq.s32.totalorder %s13, 0
    %p164 = por %p162, %p163
    %p165 = scmp.ne.s32.totalorder %s154, %s157
    %p166 = scmp.eq.s32.totalorder %s18, 3
    %p167 = por %p165, %p166
    %p168 = scmp.ne.s32.totalorder %s157, %s158
    %p169 = scmp.eq.s32.totalorder %s18, 0
    %p170 = por %p168, %p169
    %p171 = scmp.ne.s32.totalorder %s157, %s158
    %p172 = scmp.eq.s32.totalorder %s19, 3
    %p173 = por %p171, %p172
    %p175 = scmp.ne.s32.totalorder %s158, %s174
    %p176 = scmp.eq.s32.totalorder %s19, 0
    %p177 = por %p175, %p176
    %p178 = scmp.le.s32.totalorder 1, %s13
    %p179 = scmp.lt.s32.totalorder %s13, 5
    %p180 = pnand %p178, %p179
    %p181 = pneg %p180
    // Predicated region
    $region9: #{bond_float_rbf.1} parent=5 // pred_check
      _
    $region10: #{bond_float_rbf.1} parent=5 // pred_check_branch
      %183 = sbr.rel (%p180) target = $region12
    $region11: #{bond_float_rbf.1} parent=5 // pred_region
      %s184 = ssub.s32 %s13, 1
      // Predicated region
      $region13: #{bond_float_rbf.1} parent=11 // pred_check
        %p185 = pneg %p34
      $region14: #{bond_float_rbf.1} parent=11 // pred_check_branch
        %187 = sbr.rel (%p185) target = $region16
      $region15: #{bond_float_rbf.1} parent=11 // pred_region
        _
      $region16: #{bond_float_rbf.1} parent=11 // pred_fallthru
        _
      // Predicated region
      $region17: #{bond_float_rbf.1} parent=11 // pred_check
        %p188 = pneg %p81
      $region18: #{bond_float_rbf.1} parent=11 // pred_check_branch
        %190 = sbr.rel (%p188) target = $region20
      $region19: #{bond_float_rbf.1} parent=11 // pred_region
        _
      $region20: #{bond_float_rbf.1} parent=11 // pred_fallthru
        _
      // Predicated region
      $region21: #{bond_float_rbf.1} parent=11 // pred_check
        %p191 = pneg %p102
      $region22: #{bond_float_rbf.1} parent=11 // pred_check_branch
        %193 = sbr.rel (%p191) target = $region24
      $region23: #{bond_float_rbf.1} parent=11 // pred_region
        _
      $region24: #{bond_float_rbf.1} parent=11 // pred_fallthru
        _
      // Predicated region
      $region25: #{bond_float_rbf.1} parent=11 // pred_check
        %p194 = pneg %p123
      $region26: #{bond_float_rbf.1} parent=11 // pred_check_branch
        %196 = sbr.rel (%p194) target = $region28
      $region27: #{bond_float_rbf.1} parent=11 // pred_region
        _
      $region28: #{bond_float_rbf.1} parent=11 // pred_fallthru
        _
      // Predicated region
      $region29: #{bond_float_rbf.1} parent=11 // pred_check
        %p197 = pneg %p144
      $region30: #{bond_float_rbf.1} parent=11 // pred_check_branch
        %199 = sbr.rel (%p197) target = $region32
      $region31: #{bond_float_rbf.1} parent=11 // pred_region
        _
      $region32: #{bond_float_rbf.1} parent=11 // pred_fallthru
        _
    $region12: #{bond_float_rbf.1} parent=5 // pred_fallthru
      _
    %p200 = scmp.lt.s32.totalorder %s13, 4
    // Predicated region
    $region33: #{bond_float_rbf.1} parent=5 // pred_check
      %p201 = pneg %p200
    $region34: #{bond_float_rbf.1} parent=5 // pred_check_branch
      %203 = sbr.rel (%p201) target = $region36
    $region35: #{bond_float_rbf.1} parent=5 // pred_region
      // Predicated region
      $region37: #{bond_float_rbf.1} parent=35 // pred_check
        %p204 = pneg %p54
      $region38: #{bond_float_rbf.1} parent=35 // pred_check_branch
        %206 = sbr.rel (%p204) target = $region40
      $region39: #{bond_float_rbf.1} parent=35 // pred_region
        %s207 = smul.u32 8, %s13
        %p208 = scmp.lt.s32.totalorder %s207, 31
        %s209 = scalar_select %p208, %s207, 31
        %s210 = smul.addr %s209, 8
        %s211 = scalar_lea.vmem %s1, %s210
        %s212 = smul.u32 8, %s13
      $region40: #{bond_float_rbf.1} parent=35 // pred_fallthru
        _
    $region36: #{bond_float_rbf.1} parent=5 // pred_fallthru
      _
    %p213 = scmp.le.s32.totalorder 1, %s13
    %p214 = scmp.lt.s32.totalorder %s13, 5
    %p215 = pnand %p213, %p214
    %p216 = pneg %p215
    // Predicated region
    $region41: #{bond_float_rbf.1} parent=5 // pred_check
      _
    $region42: #{bond_float_rbf.1} parent=5 // pred_check_branch
      %218 = sbr.rel (%p215) target = $region44
    $region43: #{bond_float_rbf.1} parent=5 // pred_region
      %s219 = ssub.s32 %s13, 1
      %p220 = pneg %p34
      %p221 = pneg %p31
      %s222 = smul.u32 8, %s18
      %p223 = scmp.lt.s32.totalorder %s222, 31
      %s224 = scalar_select %p223, %s222, 31
      %s225 = smul.addr %s224, 8
      %s226 = scalar_lea.vmem %s1, %s225
      %p227 = pneg %p60
      %p228 = pneg %p57
      %p229 = pneg %p81
      %p230 = pneg %p78
      %p231 = pneg %p102
      %p232 = pneg %p99
      %p233 = pneg %p123
      %p234 = pneg %p120
      %p235 = pneg %p144
      %p236 = pneg %p141
      %p237 = pneg %p170
      %p238 = pneg %p167
      %s239 = smul.u32 8, %s18
      %p240 = scmp.lt.s32.totalorder %s239, 31
      %s241 = scalar_select %p240, %s239, 31
      %s242 = smul.addr %s241, 8
      %s243 = scalar_lea.vmem %s6, %s242
      %s244 = smul.u32 8, %s18
      %p245 = scmp.lt.s32.totalorder %s244, 31
      %s246 = scalar_select %p245, %s244, 31
      %s247 = smul.addr %s246, 8
      %s248 = scalar_lea.vmem %s1, %s247
      %s249 = smul.u32 8, %s18
      %s250 = smul.u32 8, %s18
      %p251 = scmp.lt.s32.totalorder %s250, 31
      %s252 = scalar_select %p251, %s250, 31
      %s253 = smul.addr %s252, 8
      %s254 = scalar_lea.vmem %s6, %s253
      %s255 = smul.u32 8, %s18
      %s256 = sld [smem:[#allocation2]]
      %v257 = vld [vmem:[%s248] sm:$0xff]
      %v258 = vld [vmem:[%s248 + $0x8] sm:$0xff]
      %v259 = vld [vmem:[%s248 + $0x10] sm:$0xff]
      %v260 = vld [vmem:[%s248 + $0x18] sm:$0xff]
      %v261 = vld [vmem:[%s248 + $0x20] sm:$0xff]
      %v262 = vld [vmem:[%s248 + $0x28] sm:$0xff]
      %v263 = vld [vmem:[%s248 + $0x30] sm:$0xff]
      %v264 = vld [vmem:[%s248 + $0x38] sm:$0xff]
      %v265 = vld [vmem:[%s3] sm:$0x1]
      %267 = vset.pattern.permute.xlu0 0
      %268 = vperm.xlu0 %267, %v257
      %v269 = vpop.permute.xlu0 %268
      %272 = vset.pattern.permute.xlu0 0
      %273 = vperm.xlu0 %272, %v258
      %v274 = vpop.permute.xlu0 %273
      %277 = vset.pattern.permute.xlu0 0
      %278 = vperm.xlu0 %277, %v259
      %v279 = vpop.permute.xlu0 %278
      %282 = vset.pattern.permute.xlu0 0
      %283 = vperm.xlu0 %282, %v260
      %v284 = vpop.permute.xlu0 %283
      %287 = vset.pattern.permute.xlu0 0
      %288 = vperm.xlu0 %287, %v261
      %v289 = vpop.permute.xlu0 %288
      %292 = vset.pattern.permute.xlu0 0
      %293 = vperm.xlu0 %292, %v262
      %v294 = vpop.permute.xlu0 %293
      %297 = vset.pattern.permute.xlu0 0
      %298 = vperm.xlu0 %297, %v263
      %v299 = vpop.permute.xlu0 %298
      %302 = vset.pattern.permute.xlu0 0
      %303 = vperm.xlu0 %302, %v264
      %v304 = vpop.permute.xlu0 %303
      %v306 = vperm.slane %v265, 0
      %v307 = vmul.f32 %v269, %v306
      %v308 = vmul.f32 %v274, %v306
      %v309 = vmul.f32 %v279, %v306
      %v310 = vmul.f32 %v284, %v306
      %v311 = vmul.f32 %v289, %v306
      %v312 = vmul.f32 %v294, %v306
      %v313 = vmul.f32 %v299, %v306
      %v314 = vmul.f32 %v304, %v306
      %v315 = vld [vmem:[%s3 + $0x1] sm:$0x1]
      %316 = vset.pattern.permute.xlu0 1
      %317 = vperm.xlu0 %316, %v257
      %v318 = vpop.permute.xlu0 %317
      %320 = vset.pattern.permute.xlu0 1
      %321 = vperm.xlu0 %320, %v258
      %v322 = vpop.permute.xlu0 %321
      %324 = vset.pattern.permute.xlu0 1
      %325 = vperm.xlu0 %324, %v259
      %v326 = vpop.permute.xlu0 %325
      %328 = vset.pattern.permute.xlu0 1
      %329 = vperm.xlu0 %328, %v260
      %v330 = vpop.permute.xlu0 %329
      %332 = vset.pattern.permute.xlu0 1
      %333 = vperm.xlu0 %332, %v261
      %v334 = vpop.permute.xlu0 %333
      %336 = vset.pattern.permute.xlu0 1
      %337 = vperm.xlu0 %336, %v262
      %v338 = vpop.permute.xlu0 %337
      %340 = vset.pattern.permute.xlu0 1
      %341 = vperm.xlu0 %340, %v263
      %v342 = vpop.permute.xlu0 %341
      %344 = vset.pattern.permute.xlu0 1
      %345 = vperm.xlu0 %344, %v264
      %v346 = vpop.permute.xlu0 %345
      %v348 = vperm.slane %v315, 0
      %v349 = vmul.f32 %v318, %v348
      %v350 = vmul.f32 %v322, %v348
      %v351 = vmul.f32 %v326, %v348
      %v352 = vmul.f32 %v330, %v348
      %v353 = vmul.f32 %v334, %v348
      %v354 = vmul.f32 %v338, %v348
      %v355 = vmul.f32 %v342, %v348
      %v356 = vmul.f32 %v346, %v348
      %v357 = vadd.f32 %v307, %v349
      %v358 = vadd.f32 %v308, %v350
      %v359 = vadd.f32 %v309, %v351
      %v360 = vadd.f32 %v310, %v352
      %v361 = vadd.f32 %v311, %v353
      %v362 = vadd.f32 %v312, %v354
      %v363 = vadd.f32 %v313, %v355
      %v364 = vadd.f32 %v314, %v356
      %v365 = vld [vmem:[%s3 + $0x2] sm:$0x1]
      %366 = vset.pattern.permute.xlu0 2
      %367 = vperm.xlu0 %366, %v257
      %v368 = vpop.permute.xlu0 %367
      %370 = vset.pattern.permute.xlu0 2
      %371 = vperm.xlu0 %370, %v258
      %v372 = vpop.permute.xlu0 %371
      %374 = vset.pattern.permute.xlu0 2
      %375 = vperm.xlu0 %374, %v259
      %v376 = vpop.permute.xlu0 %375
      %378 = vset.pattern.permute.xlu0 2
      %379 = vperm.xlu0 %378, %v260
      %v380 = vpop.permute.xlu0 %379
      %382 = vset.pattern.permute.xlu0 2
      %383 = vperm.xlu0 %382, %v261
      %v384 = vpop.permute.xlu0 %383
      %386 = vset.pattern.permute.xlu0 2
      %387 = vperm.xlu0 %386, %v262
      %v388 = vpop.permute.xlu0 %387
      %390 = vset.pattern.permute.xlu0 2
      %391 = vperm.xlu0 %390, %v263
      %v392 = vpop.permute.xlu0 %391
      %394 = vset.pattern.permute.xlu0 2
      %395 = vperm.xlu0 %394, %v264
      %v396 = vpop.permute.xlu0 %395
      %v398 = vperm.slane %v365, 0
      %v399 = vmul.f32 %v368, %v398
      %v400 = vmul.f32 %v372, %v398
      %v401 = vmul.f32 %v376, %v398
      %v402 = vmul.f32 %v380, %v398
      %v403 = vmul.f32 %v384, %v398
      %v404 = vmul.f32 %v388, %v398
      %v405 = vmul.f32 %v392, %v398
      %v406 = vmul.f32 %v396, %v398
      %v407 = vadd.f32 %v357, %v399
      %v408 = vadd.f32 %v358, %v400
      %v409 = vadd.f32 %v359, %v401
      %v410 = vadd.f32 %v360, %v402
      %v411 = vadd.f32 %v361, %v403
      %v412 = vadd.f32 %v362, %v404
      %v413 = vadd.f32 %v363, %v405
      %v414 = vadd.f32 %v364, %v406
      %v415 = vld [vmem:[%s3 + $0x3] sm:$0x1]
      %416 = vset.pattern.permute.xlu0 3
      %417 = vperm.xlu0 %416, %v257
      %v418 = vpop.permute.xlu0 %417
      %420 = vset.pattern.permute.xlu0 3
      %421 = vperm.xlu0 %420, %v258
      %v422 = vpop.permute.xlu0 %421
      %424 = vset.pattern.permute.xlu0 3
      %425 = vperm.xlu0 %424, %v259
      %v426 = vpop.permute.xlu0 %425
      %428 = vset.pattern.permute.xlu0 3
      %429 = vperm.xlu0 %428, %v260
      %v430 = vpop.permute.xlu0 %429
      %432 = vset.pattern.permute.xlu0 3
      %433 = vperm.xlu0 %432, %v261
      %v434 = vpop.permute.xlu0 %433
      %436 = vset.pattern.permute.xlu0 3
      %437 = vperm.xlu0 %436, %v262
      %v438 = vpop.permute.xlu0 %437
      %440 = vset.pattern.permute.xlu0 3
      %441 = vperm.xlu0 %440, %v263
      %v442 = vpop.permute.xlu0 %441
      %444 = vset.pattern.permute.xlu0 3
      %445 = vperm.xlu0 %444, %v264
      %v446 = vpop.permute.xlu0 %445
      %v448 = vperm.slane %v415, 0
      %v449 = vmul.f32 %v418, %v448
      %v450 = vmul.f32 %v422, %v448
      %v451 = vmul.f32 %v426, %v448
      %v452 = vmul.f32 %v430, %v448
      %v453 = vmul.f32 %v434, %v448
      %v454 = vmul.f32 %v438, %v448
      %v455 = vmul.f32 %v442, %v448
      %v456 = vmul.f32 %v446, %v448
      %v457 = vadd.f32 %v407, %v449
      %v458 = vadd.f32 %v408, %v450
      %v459 = vadd.f32 %v409, %v451
      %v460 = vadd.f32 %v410, %v452
      %v461 = vadd.f32 %v411, %v453
      %v462 = vadd.f32 %v412, %v454
      %v463 = vadd.f32 %v413, %v455
      %v464 = vadd.f32 %v414, %v456
      %v465 = vld [vmem:[%s2] sm:$0x1]
      %v467 = vperm.slane %v465, 0
      %v469 = vsub.f32 %v457, %v467
      %v470 = vsub.f32 %v458, %v467
      %v471 = vsub.f32 %v459, %v467
      %v472 = vsub.f32 %v460, %v467
      %v473 = vsub.f32 %v461, %v467
      %v474 = vsub.f32 %v462, %v467
      %v475 = vsub.f32 %v463, %v467
      %v476 = vsub.f32 %v464, %v467
      %s477 = ssub.f32 0.0, %s256
      %v478 = vmul.f32 %v469, %v469
      %v479 = vmul.f32 %v470, %v470
      %v480 = vmul.f32 %v471, %v471
      %v481 = vmul.f32 %v472, %v472
      %v482 = vmul.f32 %v473, %v473
      %v483 = vmul.f32 %v474, %v474
      %v484 = vmul.f32 %v475, %v475
      %v485 = vmul.f32 %v476, %v476
      %v486 = vstv %s477
      %v487 = vmul.f32 %v486, %v478
      %v488 = vmul.f32 %v486, %v479
      %v489 = vmul.f32 %v486, %v480
      %v490 = vmul.f32 %v486, %v481
      %v491 = vmul.f32 %v486, %v482
      %v492 = vmul.f32 %v486, %v483
      %v493 = vmul.f32 %v486, %v484
      %v494 = vmul.f32 %v486, %v485
      %v495 = vmul.f32 %v487, 1.442695
      %v496 = vpow.pop %v495
      %v497 = vmul.f32 %v488, 1.442695
      %v498 = vpow.pop %v497
      %v499 = vmul.f32 %v489, 1.442695
      %v500 = vpow.pop %v499
      %v501 = vmul.f32 %v490, 1.442695
      %v502 = vpow.pop %v501
      %v503 = vmul.f32 %v491, 1.442695
      %v504 = vpow.pop %v503
      %v505 = vmul.f32 %v492, 1.442695
      %v506 = vpow.pop %v505
      %v507 = vmul.f32 %v493, 1.442695
      %v508 = vpow.pop %v507
      %v509 = vmul.f32 %v494, 1.442695
      %v510 = vpow.pop %v509
      %v511 = vld [vmem:[%s4] sm:$0xff]
      %v512 = vld [vmem:[%s4 + $0x8] sm:$0xff]
      %v513 = vld [vmem:[%s4 + $0x10] sm:$0xff]
      %v514 = vld [vmem:[%s4 + $0x18] sm:$0xff]
      %v515 = vld [vmem:[%s4 + $0x20] sm:$0xff]
      %v516 = vld [vmem:[%s4 + $0x28] sm:$0xff]
      %v517 = vld [vmem:[%s4 + $0x30] sm:$0xff]
      %v518 = vld [vmem:[%s4 + $0x38] sm:$0xff]
      %v519 = vld [vmem:[%s4 + $0x40] sm:$0xff]
      %v520 = vld [vmem:[%s4 + $0x48] sm:$0xff]
      %v521 = vld [vmem:[%s5] sm:$0x1]
      %v523 = vperm.slane %v521, 0
      %vm525 = vcmask 654336
      %v527 = vsel %vm525, %v496, 0
      %v530 = vsel %vm525, %v498, 0
      %v533 = vsel %vm525, %v500, 0
      %v536 = vsel %vm525, %v502, 0
      %v539 = vsel %vm525, %v504, 0
      %v542 = vsel %vm525, %v506, 0
      %v545 = vsel %vm525, %v508, 0
      %v548 = vsel %vm525, %v510, 0
      %550 = vmatpush.msra.mxu0 0.0
      %551 = vmatpush.msra.mxu0 0.0
      %552 = vmatpush.msra.mxu0 0.0
      %553 = vmatpush.msra.mxu0 0.0
      %554 = vmatpush.msra.mxu0 0.0
      %555 = vmatpush.msra.mxu0 0.0
      %v556 = vand.u32 %v520, 4294901760
      %557 = vmatpush.msra.mxu0 %v556
      %v558 = vand.u32 %v519, 4294901760
      %559 = vmatpush.msra.mxu0 %v558
      %v560 = vand.u32 %v518, 4294901760
      %561 = vmatpush.msra.mxu0 %v560
      %v562 = vand.u32 %v517, 4294901760
      %563 = vmatpush.msra.mxu0 %v562
      %v564 = vand.u32 %v516, 4294901760
      %565 = vmatpush.msra.mxu0 %v564
      %v566 = vand.u32 %v515, 4294901760
      %567 = vmatpush.msra.mxu0 %v566
      %v568 = vand.u32 %v514, 4294901760
      %569 = vmatpush.msra.mxu0 %v568
      %v570 = vand.u32 %v513, 4294901760
      %571 = vmatpush.msra.mxu0 %v570
      %v572 = vand.u32 %v512, 4294901760
      %573 = vmatpush.msra.mxu0 %v572
      %v574 = vand.u32 %v511, 4294901760
      %575 = vmatpush.msra.mxu0 %v574
      %v576 = vand.u32 %v527, 4294901760
      %v577 = vsub.f32 %v527, %v576
      %v578 = vand.u32 %v577, 4294901760
      %v579 = vsub.f32 %v577, %v578
      %v580 = vand.u32 %v579, 4294901760
      %581 = vmatmul.f32.gmra.mxu0 %v580
      %v582 = vpop.f32.mrf.mxu0
      %v583 = vadd.f32 %v523, %v582
      %v584 = vand.u32 %v530, 4294901760
      %v585 = vsub.f32 %v530, %v584
      %v586 = vand.u32 %v585, 4294901760
      %v587 = vsub.f32 %v585, %v586
      %v588 = vand.u32 %v587, 4294901760
      %589 = vmatmul.f32.gmra.mxu0 %v588
      %v590 = vpop.f32.mrf.mxu0
      %v591 = vadd.f32 %v523, %v590
      %v592 = vand.u32 %v533, 4294901760
      %v593 = vsub.f32 %v533, %v592
      %v594 = vand.u32 %v593, 4294901760
      %v595 = vsub.f32 %v593, %v594
      %v596 = vand.u32 %v595, 4294901760
      %597 = vmatmul.f32.gmra.mxu0 %v596
      %v598 = vpop.f32.mrf.mxu0
      %v599 = vadd.f32 %v523, %v598
      %v600 = vand.u32 %v536, 4294901760
      %v601 = vsub.f32 %v536, %v600
      %v602 = vand.u32 %v601, 4294901760
      %v603 = vsub.f32 %v601, %v602
      %v604 = vand.u32 %v603, 4294901760
      %605 = vmatmul.f32.gmra.mxu0 %v604
      %v606 = vpop.f32.mrf.mxu0
      %v607 = vadd.f32 %v523, %v606
      %v608 = vand.u32 %v539, 4294901760
      %v609 = vsub.f32 %v539, %v608
      %v610 = vand.u32 %v609, 4294901760
      %v611 = vsub.f32 %v609, %v610
      %v612 = vand.u32 %v611, 4294901760
      %613 = vmatmul.f32.gmra.mxu0 %v612
      %v614 = vpop.f32.mrf.mxu0
      %v615 = vadd.f32 %v523, %v614
      %v616 = vand.u32 %v542, 4294901760
      %v617 = vsub.f32 %v542, %v616
      %v618 = vand.u32 %v617, 4294901760
      %v619 = vsub.f32 %v617, %v618
      %v620 = vand.u32 %v619, 4294901760
      %621 = vmatmul.f32.gmra.mxu0 %v620
      %v622 = vpop.f32.mrf.mxu0
      %v623 = vadd.f32 %v523, %v622
      %v624 = vand.u32 %v545, 4294901760
      %v625 = vsub.f32 %v545, %v624
      %v626 = vand.u32 %v625, 4294901760
      %v627 = vsub.f32 %v625, %v626
      %v628 = vand.u32 %v627, 4294901760
      %629 = vmatmul.f32.gmra.mxu0 %v628
      %v630 = vpop.f32.mrf.mxu0
      %v631 = vadd.f32 %v523, %v630
      %v632 = vand.u32 %v548, 4294901760
      %v633 = vsub.f32 %v548, %v632
      %v634 = vand.u32 %v633, 4294901760
      %v635 = vsub.f32 %v633, %v634
      %v636 = vand.u32 %v635, 4294901760
      %637 = vmatmul.f32.gmra.mxu0 %v636
      %v638 = vpop.f32.mrf.mxu0
      %v639 = vadd.f32 %v523, %v638
      %640 = vdwg.mxu0
      %641 = vmatpush.msra.mxu0 0.0
      %642 = vmatpush.msra.mxu0 0.0
      %643 = vmatpush.msra.mxu0 0.0
      %644 = vmatpush.msra.mxu0 0.0
      %645 = vmatpush.msra.mxu0 0.0
      %646 = vmatpush.msra.mxu0 0.0
      %v647 = vand.u32 %v520, 4294901760
      %v648 = vsub.f32 %v520, %v647
      %v649 = vand.u32 %v648, 4294901760
      %v650 = vsub.f32 %v648, %v649
      %v651 = vand.u32 %v650, 4294901760
      %652 = vmatpush.msra.mxu0 %v651
      %v653 = vand.u32 %v519, 4294901760
      %v654 = vsub.f32 %v519, %v653
      %v655 = vand.u32 %v654, 4294901760
      %v656 = vsub.f32 %v654, %v655
      %v657 = vand.u32 %v656, 4294901760
      %658 = vmatpush.msra.mxu0 %v657
      %v659 = vand.u32 %v518, 4294901760
      %v660 = vsub.f32 %v518, %v659
      %v661 = vand.u32 %v660, 4294901760
      %v662 = vsub.f32 %v660, %v661
      %v663 = vand.u32 %v662, 4294901760
      %664 = vmatpush.msra.mxu0 %v663
      %v665 = vand.u32 %v517, 4294901760
      %v666 = vsub.f32 %v517, %v665
      %v667 = vand.u32 %v666, 4294901760
      %v668 = vsub.f32 %v666, %v667
      %v669 = vand.u32 %v668, 4294901760
      %670 = vmatpush.msra.mxu0 %v669
      %v671 = vand.u32 %v516, 4294901760
      %v672 = vsub.f32 %v516, %v671
      %v673 = vand.u32 %v672, 4294901760
      %v674 = vsub.f32 %v672, %v673
      %v675 = vand.u32 %v674, 4294901760
      %676 = vmatpush.msra.mxu0 %v675
      %v677 = vand.u32 %v515, 4294901760
      %v678 = vsub.f32 %v515, %v677
      %v679 = vand.u32 %v678, 4294901760
      %v680 = vsub.f32 %v678, %v679
      %v681 = vand.u32 %v680, 4294901760
      %682 = vmatpush.msra.mxu0 %v681
      %v683 = vand.u32 %v514, 4294901760
      %v684 = vsub.f32 %v514, %v683
      %v685 = vand.u32 %v684, 4294901760
      %v686 = vsub.f32 %v684, %v685
      %v687 = vand.u32 %v686, 4294901760
      %688 = vmatpush.msra.mxu0 %v687
      %v689 = vand.u32 %v513, 4294901760
      %v690 = vsub.f32 %v513, %v689
      %v691 = vand.u32 %v690, 4294901760
      %v692 = vsub.f32 %v690, %v691
      %v693 = vand.u32 %v692, 4294901760
      %694 = vmatpush.msra.mxu0 %v693
      %v695 = vand.u32 %v512, 4294901760
      %v696 = vsub.f32 %v512, %v695
      %v697 = vand.u32 %v696, 4294901760
      %v698 = vsub.f32 %v696, %v697
      %v699 = vand.u32 %v698, 4294901760
      %700 = vmatpush.msra.mxu0 %v699
      %v701 = vand.u32 %v511, 4294901760
      %v702 = vsub.f32 %v511, %v701
      %v703 = vand.u32 %v702, 4294901760
      %v704 = vsub.f32 %v702, %v703
      %v705 = vand.u32 %v704, 4294901760
      %706 = vmatpush.msra.mxu0 %v705
      %v707 = vand.u32 %v527, 4294901760
      %708 = vmatmul.f32.gmra.mxu0 %v707
      %v709 = vpop.f32.mrf.mxu0
      %v710 = vadd.f32 %v583, %v709
      %v711 = vand.u32 %v530, 4294901760
      %712 = vmatmul.f32.gmra.mxu0 %v711
      %v713 = vpop.f32.mrf.mxu0
      %v714 = vadd.f32 %v591, %v713
      %v715 = vand.u32 %v533, 4294901760
      %716 = vmatmul.f32.gmra.mxu0 %v715
      %v717 = vpop.f32.mrf.mxu0
      %v718 = vadd.f32 %v599, %v717
      %v719 = vand.u32 %v536, 4294901760
      %720 = vmatmul.f32.gmra.mxu0 %v719
      %v721 = vpop.f32.mrf.mxu0
      %v722 = vadd.f32 %v607, %v721
      %v723 = vand.u32 %v539, 4294901760
      %724 = vmatmul.f32.gmra.mxu0 %v723
      %v725 = vpop.f32.mrf.mxu0
      %v726 = vadd.f32 %v615, %v725
      %v727 = vand.u32 %v542, 4294901760
      %728 = vmatmul.f32.gmra.mxu0 %v727
      %v729 = vpop.f32.mrf.mxu0
      %v730 = vadd.f32 %v623, %v729
      %v731 = vand.u32 %v545, 4294901760
      %732 = vmatmul.f32.gmra.mxu0 %v731
      %v733 = vpop.f32.mrf.mxu0
      %v734 = vadd.f32 %v631, %v733
      %v735 = vand.u32 %v548, 4294901760
      %736 = vmatmul.f32.gmra.mxu0 %v735
      %v737 = vpop.f32.mrf.mxu0
      %v738 = vadd.f32 %v639, %v737
      %739 = vdwg.mxu0
      %740 = vmatpush.msra.mxu0 0.0
      %741 = vmatpush.msra.mxu0 0.0
      %742 = vmatpush.msra.mxu0 0.0
      %743 = vmatpush.msra.mxu0 0.0
      %744 = vmatpush.msra.mxu0 0.0
      %745 = vmatpush.msra.mxu0 0.0
      %v746 = vand.u32 %v520, 4294901760
      %v747 = vsub.f32 %v520, %v746
      %748 = vmatpush.msra.mxu0 %v747
      %v749 = vand.u32 %v519, 4294901760
      %v750 = vsub.f32 %v519, %v749
      %751 = vmatpush.msra.mxu0 %v750
      %v752 = vand.u32 %v518, 4294901760
      %v753 = vsub.f32 %v518, %v752
      %754 = vmatpush.msra.mxu0 %v753
      %v755 = vand.u32 %v517, 4294901760
      %v756 = vsub.f32 %v517, %v755
      %757 = vmatpush.msra.mxu0 %v756
      %v758 = vand.u32 %v516, 4294901760
      %v759 = vsub.f32 %v516, %v758
      %760 = vmatpush.msra.mxu0 %v759
      %v761 = vand.u32 %v515, 4294901760
      %v762 = vsub.f32 %v515, %v761
      %763 = vmatpush.msra.mxu0 %v762
      %v764 = vand.u32 %v514, 4294901760
      %v765 = vsub.f32 %v514, %v764
      %766 = vmatpush.msra.mxu0 %v765
      %v767 = vand.u32 %v513, 4294901760
      %v768 = vsub.f32 %v513, %v767
      %769 = vmatpush.msra.mxu0 %v768
      %v770 = vand.u32 %v512, 4294901760
      %v771 = vsub.f32 %v512, %v770
      %772 = vmatpush.msra.mxu0 %v771
      %v773 = vand.u32 %v511, 4294901760
      %v774 = vsub.f32 %v511, %v773
      %775 = vmatpush.msra.mxu0 %v774
      %v776 = vand.u32 %v527, 4294901760
      %v777 = vsub.f32 %v527, %v776
      %778 = vmatmul.f32.gmra.mxu0 %v777
      %v779 = vpop.f32.mrf.mxu0
      %v780 = vadd.f32 %v710, %v779
      %v781 = vand.u32 %v530, 4294901760
      %v782 = vsub.f32 %v530, %v781
      %783 = vmatmul.f32.gmra.mxu0 %v782
      %v784 = vpop.f32.mrf.mxu0
      %v785 = vadd.f32 %v714, %v784
      %v786 = vand.u32 %v533, 4294901760
      %v787 = vsub.f32 %v533, %v786
      %788 = vmatmul.f32.gmra.mxu0 %v787
      %v789 = vpop.f32.mrf.mxu0
      %v790 = vadd.f32 %v718, %v789
      %v791 = vand.u32 %v536, 4294901760
      %v792 = vsub.f32 %v536, %v791
      %793 = vmatmul.f32.gmra.mxu0 %v792
      %v794 = vpop.f32.mrf.mxu0
      %v795 = vadd.f32 %v722, %v794
      %v796 = vand.u32 %v539, 4294901760
      %v797 = vsub.f32 %v539, %v796
      %798 = vmatmul.f32.gmra.mxu0 %v797
      %v799 = vpop.f32.mrf.mxu0
      %v800 = vadd.f32 %v726, %v799
      %v801 = vand.u32 %v542, 4294901760
      %v802 = vsub.f32 %v542, %v801
      %803 = vmatmul.f32.gmra.mxu0 %v802
      %v804 = vpop.f32.mrf.mxu0
      %v805 = vadd.f32 %v730, %v804
      %v806 = vand.u32 %v545, 4294901760
      %v807 = vsub.f32 %v545, %v806
      %808 = vmatmul.f32.gmra.mxu0 %v807
      %v809 = vpop.f32.mrf.mxu0
      %v810 = vadd.f32 %v734, %v809
      %v811 = vand.u32 %v548, 4294901760
      %v812 = vsub.f32 %v548, %v811
      %813 = vmatmul.f32.gmra.mxu0 %v812
      %v814 = vpop.f32.mrf.mxu0
      %v815 = vadd.f32 %v738, %v814
      %816 = vdwg.mxu0
      %817 = vmatpush.msra.mxu0 0.0
      %818 = vmatpush.msra.mxu0 0.0
      %819 = vmatpush.msra.mxu0 0.0
      %820 = vmatpush.msra.mxu0 0.0
      %821 = vmatpush.msra.mxu0 0.0
      %822 = vmatpush.msra.mxu0 0.0
      %v823 = vand.u32 %v520, 4294901760
      %824 = vmatpush.msra.mxu0 %v823
      %v825 = vand.u32 %v519, 4294901760
      %826 = vmatpush.msra.mxu0 %v825
      %v827 = vand.u32 %v518, 4294901760
      %828 = vmatpush.msra.mxu0 %v827
      %v829 = vand.u32 %v517, 4294901760
      %830 = vmatpush.msra.mxu0 %v829
      %v831 = vand.u32 %v516, 4294901760
      %832 = vmatpush.msra.mxu0 %v831
      %v833 = vand.u32 %v515, 4294901760
      %834 = vmatpush.msra.mxu0 %v833
      %v835 = vand.u32 %v514, 4294901760
      %836 = vmatpush.msra.mxu0 %v835
      %v837 = vand.u32 %v513, 4294901760
      %838 = vmatpush.msra.mxu0 %v837
      %v839 = vand.u32 %v512, 4294901760
      %840 = vmatpush.msra.mxu0 %v839
      %v841 = vand.u32 %v511, 4294901760
      %842 = vmatpush.msra.mxu0 %v841
      %v843 = vand.u32 %v527, 4294901760
      %v844 = vsub.f32 %v527, %v843
      %v845 = vand.u32 %v844, 4294901760
      %846 = vmatmul.f32.gmra.mxu0 %v845
      %v847 = vpop.f32.mrf.mxu0
      %v848 = vadd.f32 %v780, %v847
      %v849 = vand.u32 %v530, 4294901760
      %v850 = vsub.f32 %v530, %v849
      %v851 = vand.u32 %v850, 4294901760
      %852 = vmatmul.f32.gmra.mxu0 %v851
      %v853 = vpop.f32.mrf.mxu0
      %v854 = vadd.f32 %v785, %v853
      %v855 = vand.u32 %v533, 4294901760
      %v856 = vsub.f32 %v533, %v855
      %v857 = vand.u32 %v856, 4294901760
      %858 = vmatmul.f32.gmra.mxu0 %v857
      %v859 = vpop.f32.mrf.mxu0
      %v860 = vadd.f32 %v790, %v859
      %v861 = vand.u32 %v536, 4294901760
      %v862 = vsub.f32 %v536, %v861
      %v863 = vand.u32 %v862, 4294901760
      %864 = vmatmul.f32.gmra.mxu0 %v863
      %v865 = vpop.f32.mrf.mxu0
      %v866 = vadd.f32 %v795, %v865
      %v867 = vand.u32 %v539, 4294901760
      %v868 = vsub.f32 %v539, %v867
      %v869 = vand.u32 %v868, 4294901760
      %870 = vmatmul.f32.gmra.mxu0 %v869
      %v871 = vpop.f32.mrf.mxu0
      %v872 = vadd.f32 %v800, %v871
      %v873 = vand.u32 %v542, 4294901760
      %v874 = vsub.f32 %v542, %v873
      %v875 = vand.u32 %v874, 4294901760
      %876 = vmatmul.f32.gmra.mxu0 %v875
      %v877 = vpop.f32.mrf.mxu0
      %v878 = vadd.f32 %v805, %v877
      %v879 = vand.u32 %v545, 4294901760
      %v880 = vsub.f32 %v545, %v879
      %v881 = vand.u32 %v880, 4294901760
      %882 = vmatmul.f32.gmra.mxu0 %v881
      %v883 = vpop.f32.mrf.mxu0
      %v884 = vadd.f32 %v810, %v883
      %v885 = vand.u32 %v548, 4294901760
      %v886 = vsub.f32 %v548, %v885
      %v887 = vand.u32 %v886, 4294901760
      %888 = vmatmul.f32.gmra.mxu0 %v887
      %v889 = vpop.f32.mrf.mxu0
      %v890 = vadd.f32 %v815, %v889
      %891 = vdwg.mxu0
      %892 = vmatpush.msra.mxu0 0.0
      %893 = vmatpush.msra.mxu0 0.0
      %894 = vmatpush.msra.mxu0 0.0
      %895 = vmatpush.msra.mxu0 0.0
      %896 = vmatpush.msra.mxu0 0.0
      %897 = vmatpush.msra.mxu0 0.0
      %v898 = vand.u32 %v520, 4294901760
      %v899 = vsub.f32 %v520, %v898
      %v900 = vand.u32 %v899, 4294901760
      %901 = vmatpush.msra.mxu0 %v900
      %v902 = vand.u32 %v519, 4294901760
      %v903 = vsub.f32 %v519, %v902
      %v904 = vand.u32 %v903, 4294901760
      %905 = vmatpush.msra.mxu0 %v904
      %v906 = vand.u32 %v518, 4294901760
      %v907 = vsub.f32 %v518, %v906
      %v908 = vand.u32 %v907, 4294901760
      %909 = vmatpush.msra.mxu0 %v908
      %v910 = vand.u32 %v517, 4294901760
      %v911 = vsub.f32 %v517, %v910
      %v912 = vand.u32 %v911, 4294901760
      %913 = vmatpush.msra.mxu0 %v912
      %v914 = vand.u32 %v516, 4294901760
      %v915 = vsub.f32 %v516, %v914
      %v916 = vand.u32 %v915, 4294901760
      %917 = vmatpush.msra.mxu0 %v916
      %v918 = vand.u32 %v515, 4294901760
      %v919 = vsub.f32 %v515, %v918
      %v920 = vand.u32 %v919, 4294901760
      %921 = vmatpush.msra.mxu0 %v920
      %v922 = vand.u32 %v514, 4294901760
      %v923 = vsub.f32 %v514, %v922
      %v924 = vand.u32 %v923, 4294901760
      %925 = vmatpush.msra.mxu0 %v924
      %v926 = vand.u32 %v513, 4294901760
      %v927 = vsub.f32 %v513, %v926
      %v928 = vand.u32 %v927, 4294901760
      %929 = vmatpush.msra.mxu0 %v928
      %v930 = vand.u32 %v512, 4294901760
      %v931 = vsub.f32 %v512, %v930
      %v932 = vand.u32 %v931, 4294901760
      %933 = vmatpush.msra.mxu0 %v932
      %v934 = vand.u32 %v511, 4294901760
      %v935 = vsub.f32 %v511, %v934
      %v936 = vand.u32 %v935, 4294901760
      %937 = vmatpush.msra.mxu0 %v936
      %v938 = vand.u32 %v527, 4294901760
      %939 = vmatmul.f32.gmra.mxu0 %v938
      %v940 = vpop.f32.mrf.mxu0
      %v941 = vadd.f32 %v848, %v940
      %v942 = vand.u32 %v530, 4294901760
      %943 = vmatmul.f32.gmra.mxu0 %v942
      %v944 = vpop.f32.mrf.mxu0
      %v945 = vadd.f32 %v854, %v944
      %v946 = vand.u32 %v533, 4294901760
      %947 = vmatmul.f32.gmra.mxu0 %v946
      %v948 = vpop.f32.mrf.mxu0
      %v949 = vadd.f32 %v860, %v948
      %v950 = vand.u32 %v536, 4294901760
      %951 = vmatmul.f32.gmra.mxu0 %v950
      %v952 = vpop.f32.mrf.mxu0
      %v953 = vadd.f32 %v866, %v952
      %v954 = vand.u32 %v539, 4294901760
      %955 = vmatmul.f32.gmra.mxu0 %v954
      %v956 = vpop.f32.mrf.mxu0
      %v957 = vadd.f32 %v872, %v956
      %v958 = vand.u32 %v542, 4294901760
      %959 = vmatmul.f32.gmra.mxu0 %v958
      %v960 = vpop.f32.mrf.mxu0
      %v961 = vadd.f32 %v878, %v960
      %v962 = vand.u32 %v545, 4294901760
      %963 = vmatmul.f32.gmra.mxu0 %v962
      %v964 = vpop.f32.mrf.mxu0
      %v965 = vadd.f32 %v884, %v964
      %v966 = vand.u32 %v548, 4294901760
      %967 = vmatmul.f32.gmra.mxu0 %v966
      %v968 = vpop.f32.mrf.mxu0
      %v969 = vadd.f32 %v890, %v968
      %970 = vdwg.mxu0
      %971 = vmatpush.msra.mxu0 0.0
      %972 = vmatpush.msra.mxu0 0.0
      %973 = vmatpush.msra.mxu0 0.0
      %974 = vmatpush.msra.mxu0 0.0
      %975 = vmatpush.msra.mxu0 0.0
      %976 = vmatpush.msra.mxu0 0.0
      %v977 = vand.u32 %v520, 4294901760
      %978 = vmatpush.msra.mxu0 %v977
      %v979 = vand.u32 %v519, 4294901760
      %980 = vmatpush.msra.mxu0 %v979
      %v981 = vand.u32 %v518, 4294901760
      %982 = vmatpush.msra.mxu0 %v981
      %v983 = vand.u32 %v517, 4294901760
      %984 = vmatpush.msra.mxu0 %v983
      %v985 = vand.u32 %v516, 4294901760
      %986 = vmatpush.msra.mxu0 %v985
      %v987 = vand.u32 %v515, 4294901760
      %988 = vmatpush.msra.mxu0 %v987
      %v989 = vand.u32 %v514, 4294901760
      %990 = vmatpush.msra.mxu0 %v989
      %v991 = vand.u32 %v513, 4294901760
      %992 = vmatpush.msra.mxu0 %v991
      %v993 = vand.u32 %v512, 4294901760
      %994 = vmatpush.msra.mxu0 %v993
      %v995 = vand.u32 %v511, 4294901760
      %996 = vmatpush.msra.mxu0 %v995
      %v997 = vand.u32 %v527, 4294901760
      %998 = vmatmul.f32.gmra.mxu0 %v997
      %v999 = vpop.f32.mrf.mxu0
      %v1000 = vadd.f32 %v941, %v999
      %v1001 = vand.u32 %v530, 4294901760
      %1002 = vmatmul.f32.gmra.mxu0 %v1001
      %v1003 = vpop.f32.mrf.mxu0
      %v1004 = vadd.f32 %v945, %v1003
      %v1005 = vand.u32 %v533, 4294901760
      %1006 = vmatmul.f32.gmra.mxu0 %v1005
      %v1007 = vpop.f32.mrf.mxu0
      %v1008 = vadd.f32 %v949, %v1007
      %v1009 = vand.u32 %v536, 4294901760
      %1010 = vmatmul.f32.gmra.mxu0 %v1009
      %v1011 = vpop.f32.mrf.mxu0
      %v1012 = vadd.f32 %v953, %v1011
      %v1013 = vand.u32 %v539, 4294901760
      %1014 = vmatmul.f32.gmra.mxu0 %v1013
      %v1015 = vpop.f32.mrf.mxu0
      %v1016 = vadd.f32 %v957, %v1015
      %v1017 = vand.u32 %v542, 4294901760
      %1018 = vmatmul.f32.gmra.mxu0 %v1017
      %v1019 = vpop.f32.mrf.mxu0
      %v1020 = vadd.f32 %v961, %v1019
      %v1021 = vand.u32 %v545, 4294901760
      %1022 = vmatmul.f32.gmra.mxu0 %v1021
      %v1023 = vpop.f32.mrf.mxu0
      %v1024 = vadd.f32 %v965, %v1023
      %v1025 = vand.u32 %v548, 4294901760
      %1026 = vmatmul.f32.gmra.mxu0 %v1025
      %v1027 = vpop.f32.mrf.mxu0
      %v1028 = vadd.f32 %v969, %v1027
      %1029 = vdwg.mxu0
      %1030 = vst [vmem:[%s254] sm:$0xff] %v1000
      %1031 = vst [vmem:[%s254 + $0x8] sm:$0xff] %v1004
      %1032 = vst [vmem:[%s254 + $0x10] sm:$0xff] %v1008
      %1033 = vst [vmem:[%s254 + $0x18] sm:$0xff] %v1012
      %1034 = vst [vmem:[%s254 + $0x20] sm:$0xff] %v1016
      %1035 = vst [vmem:[%s254 + $0x28] sm:$0xff] %v1020
      %1036 = vst [vmem:[%s254 + $0x30] sm:$0xff] %v1024
      %1037 = vst [vmem:[%s254 + $0x38] sm:$0xff] %v1028
      %s1038 = smul.u32 8, %s18
      %p1039 = scmp.lt.s32.totalorder %s1038, 31
      %s1040 = scalar_select %p1039, %s1038, 31
      %s1041 = smul.addr %s1040, 8
      %s1042 = scalar_lea.vmem %s6, %s1041
      // Predicated region
      $region45: #{bond_float_rbf.1} parent=43 // pred_check
        %p1043 = pneg %p167
      $region46: #{bond_float_rbf.1} parent=43 // pred_check_branch
        %1045 = sbr.rel (%p1043) target = $region48
      $region47: #{bond_float_rbf.1} parent=43 // pred_region
        %s1046 = smul.u32 8, %s18
      $region48: #{bond_float_rbf.1} parent=43 // pred_fallthru
        _
    $region44: #{bond_float_rbf.1} parent=5 // pred_fallthru
      _
    %p1047 = scmp.le.s32.totalorder 2, %s13
    // Predicated region
    $region49: #{bond_float_rbf.1} parent=5 // pred_check
      %p1048 = pneg %p1047
    $region50: #{bond_float_rbf.1} parent=5 // pred_check_branch
      %1050 = sbr.rel (%p1048) target = $region52
    $region51: #{bond_float_rbf.1} parent=5 // pred_region
      %s1051 = ssub.s32 %s13, 2
      // Predicated region
      $region53: #{bond_float_rbf.1} parent=51 // pred_check
        %p1052 = pneg %p173
      $region54: #{bond_float_rbf.1} parent=51 // pred_check_branch
        %1054 = sbr.rel (%p1052) target = $region56
      $region55: #{bond_float_rbf.1} parent=51 // pred_region
        %s1055 = smul.u32 8, %s19
        %p1056 = scmp.lt.s32.totalorder %s1055, 31
        %s1057 = scalar_select %p1056, %s1055, 31
        %s1058 = smul.addr %s1057, 8
        %s1059 = scalar_lea.vmem %s6, %s1058
      $region56: #{bond_float_rbf.1} parent=51 // pred_fallthru
        _
    $region52: #{bond_float_rbf.1} parent=5 // pred_fallthru
      _
  $region6: #{bond_float_rbf.1} parent=0 // loop_footer
    %s17 = sadd.s32 1, %s13
  $region7: #{bond_float_rbf.1} parent=0 // loop_footer_branch
    %12 = sbr.rel target = $region3
  $region8: #{bond_float_rbf.1} parent=0 // loop_exit
    _

</llo_original>
